<compile_context>
chip_gen: v6e
topology: v6e:2x2x1
jax: 0.10.0
libtpu: 0.0.40
codegen_flags: <defaults>
</compile_context>

<pallas_src>
import jax
import jax.numpy as jnp
from jax.experimental import pallas as pl
from jax.experimental.pallas import tpu as pltpu


def _round_up(x, m):
    return (x + m - 1) // m * m


def _choose_batch_tile(B, block_b):
    """Batch tile: multiple of 8, <= block_b, and (when possible) small enough
    that the grid has >= 2 steps so v7x's two TensorCores both get work."""
    B8 = _round_up(max(B, 1), 8)
    half = _round_up((B8 + 1) // 2, 8)
    return max(8, min(block_b, half))


def ffnn_kernel(x_ref, w1_ref, b1_ref, w2_ref, b2_ref, o_ref):
    # z1 = ReLU(x @ W1 + b1); the f32 -> bf16 cast is free VPU filler in this
    # memory-bound regime.
    x = x_ref[...].astype(jnp.bfloat16)
    z1 = jnp.dot(x, w1_ref[...], preferred_element_type=jnp.float32)
    z1 = jnp.maximum(z1 + b1_ref[...], 0.0)

    # z2 = ReLU(z1 @ W2 + b2)  (the reference module applies ReLU *before* the
    # log-softmax -- unusual, but that is what FFNN.forward does).
    z2 = jnp.dot(z1.astype(jnp.bfloat16), w2_ref[...],
                 preferred_element_type=jnp.float32)
    z2 = jnp.maximum(z2 + b2_ref[...], 0.0)

    # Numerically stable log-softmax over the (unpadded) class axis.
    m = jnp.max(z2, axis=-1, keepdims=True)
    shifted = z2 - m
    lse = jnp.log(jnp.sum(jnp.exp(shifted), axis=-1, keepdims=True))
    o_ref[...] = (shifted - lse).astype(o_ref.dtype)


def prepare_params(w1, b1, w2, b2):
    """Pad/cast the weights ONCE (call outside the per-forward hot path).

    Only the hidden dim is padded (to a multiple of 128) so both matmuls keep
    lane-aligned operands; in_dim and n_classes stay at their true sizes."""
    in_dim, h = w1.shape
    n_classes = w2.shape[1]
    H = _round_up(h, 128)
    w1p = jnp.zeros((in_dim, H), jnp.bfloat16).at[:, :h].set(
        w1.astype(jnp.bfloat16))
    b1p = jnp.zeros((1, H), jnp.float32).at[:, :h].set(
        jnp.reshape(b1, (1, h)).astype(jnp.float32))
    w2p = jnp.zeros((H, n_classes), jnp.bfloat16).at[:h, :].set(
        w2.astype(jnp.bfloat16))
    b2p = jnp.reshape(b2, (1, n_classes)).astype(jnp.float32)
    return w1p, b1p, w2p, b2p


def ffnn_forward(x, w1p, b1p, w2p, b2p, *, hidden_dim=None, block_b=1024):
    """x: (B, input_dim) f32; w1p/b1p/w2p/b2p from prepare_params.
    Returns (B, n_classes) f32 log-probabilities."""
    B, in_dim = x.shape
    H = w1p.shape[1]
    n_classes = w2p.shape[1]
    h = hidden_dim if hidden_dim is not None else H  # for the cost estimate

    # Batch tile / grid: only the batch dim is (minimally) padded.
    tb = _choose_batch_tile(B, block_b)
    Bp = _round_up(B, tb)
    if Bp != B:
        x = jnp.pad(x, ((0, Bp - B), (0, 0)))
    grid = (Bp // tb,)

    # Generation-aware VMEM budget (v5e/v6e: 128 MiB, v7x: 64 MiB per TC).
    try:
        vmem_cap = int(pltpu.get_tpu_info().vmem_capacity_bytes)
    except Exception:  # fall back to the smallest current generation (v7x)
        vmem_cap = 64 << 20

    weight_bytes = (in_dim * H + H * n_classes) * 2 + (H + n_classes) * 4
    single_buffer_weights = 2 * weight_bytes > vmem_cap // 3
    w_kwargs = ({"pipeline_mode": pl.Buffered(1)}
                if single_buffer_weights else {})
    w_bufs = 1 if single_buffer_weights else 2

    # Rough per-step footprint: double-buffered x/out tiles + resident weights
    # + f32/bf16 temporaries.  Keep well under the physical VMEM cap.
    tile_bytes = tb * in_dim * 4 + tb * n_classes * 4
    tmp_bytes = tb * H * 6 + tb * in_dim * 2 + 4 * tb * n_classes * 4
    footprint = 2 * tile_bytes + w_bufs * weight_bytes + tmp_bytes
    vmem_limit = int(min(max(footprint * 1.5 + (2 << 20), 32 << 20),
                         max(vmem_cap - (16 << 20), 32 << 20)))

    # Advisory cost with real (unpadded) dims.
    cost = pl.CostEstimate(
        flops=2 * B * (in_dim * h + h * n_classes),
        transcendentals=B * (n_classes + 1),
        bytes_accessed=B * in_dim * 4 + weight_bytes + B * n_classes * 4,
    )

    out = pl.pallas_call(
        ffnn_kernel,
        out_shape=jax.ShapeDtypeStruct((Bp, n_classes), jnp.float32),
        grid_spec=pltpu.PrefetchScalarGridSpec(
            num_scalar_prefetch=0,
            grid=grid,
            in_specs=[
                pl.BlockSpec((tb, in_dim), lambda i: (i, 0)),     # streamed x
                pl.BlockSpec((in_dim, H), lambda i: (0, 0), **w_kwargs),
                pl.BlockSpec((1, H), lambda i: (0, 0), **w_kwargs),
                pl.BlockSpec((H, n_classes), lambda i: (0, 0), **w_kwargs),
                pl.BlockSpec((1, n_classes), lambda i: (0, 0), **w_kwargs),
            ],
            out_specs=pl.BlockSpec((tb, n_classes), lambda i: (i, 0)),
        ),
        compiler_params=pltpu.CompilerParams(
            dimension_semantics=("parallel",),
            vmem_limit_bytes=vmem_limit,
        ),
        cost_estimate=cost,
    )(x, w1p, b1p, w2p, b2p)

    return out if Bp == B else out[:B]


def init_params(key, input_dim, h, n_classes=5):
    """Deterministic, PyTorch-Linear-style uniform init (synthetic weights)."""
    k1, k2, k3, k4 = jax.random.split(key, 4)
    bound1 = 1.0 / (input_dim ** 0.5)
    bound2 = 1.0 / (h ** 0.5)
    w1 = jax.random.uniform(k1, (input_dim, h), jnp.float32, -bound1, bound1)
    b1 = jax.random.uniform(k2, (1, h), jnp.float32, -bound1, bound1)
    w2 = jax.random.uniform(k3, (h, n_classes), jnp.float32, -bound2, bound2)
    b2 = jax.random.uniform(k4, (1, n_classes), jnp.float32, -bound2, bound2)
    return w1, b1, w2, b2


# TODO(synk): compute_Loss (nn.NLLLoss) is training-only and not part of the
# forward pass, so it is intentionally not implemented as a kernel.

if __name__ == "__main__":
    batch, input_dim, h = 8, 32, 32

    key = jax.random.PRNGKey(0)
    kx, kp = jax.random.split(key)
    x = jax.random.normal(kx, (batch, input_dim), jnp.float32)
    w1, b1, w2, b2 = init_params(kp, input_dim, h)

    # Pad/cast the weights ONCE (hoisted out of the per-call path).
    w1p, b1p, w2p, b2p = prepare_params(w1, b1, w2, b2)

    out = ffnn_forward(x, w1p, b1p, w2p, b2p, hidden_dim=h)
    out = jax.block_until_ready(out)

    # Reference mirroring the kernel's bf16-operand / f32-accumulate matmuls.
    xb, w1b, w2b = (t.astype(jnp.bfloat16) for t in (x, w1, w2))
    z1 = jnp.maximum(jnp.dot(xb, w1b, preferred_element_type=jnp.float32)
                     + b1.reshape(1, -1), 0.0)
    z2 = jnp.maximum(jnp.dot(z1.astype(jnp.bfloat16), w2b,
                             preferred_element_type=jnp.float32)
                     + b2.reshape(1, -1), 0.0)
    ref = jax.nn.log_softmax(z2, axis=-1)

    assert out.shape == (batch, 5)
    assert jnp.allclose(out, ref, atol=1e-3, rtol=1e-3), float(
        jnp.max(jnp.abs(out - ref)))

    print("KERNEL_OK")
</pallas_src>

<mosaic_0001>
module attributes {stable_mosaic.version = 11 : i64} {
  func.func @ffnn_kernel(%arg0: i32, %arg1: memref<8x32xf32, #tpu.memory_space<vmem>>, %arg2: memref<32x128xbf16, #tpu.memory_space<vmem>>, %arg3: memref<1x128xf32, #tpu.memory_space<vmem>>, %arg4: memref<128x5xbf16, #tpu.memory_space<vmem>>, %arg5: memref<1x5xf32, #tpu.memory_space<vmem>>, %arg6: memref<8x5xf32, #tpu.memory_space<vmem>>) attributes {dimension_semantics = [#tpu.dimension_semantics<parallel>], iteration_bounds = array<i64: 1>, scalar_prefetch = 0 : i64, scratch_operands = 0 : i64, tpu.core_type = #tpu.core_type<tc>, window_params = [{transform_indices = @transform_0, window_bounds = array<i64: 8, 32>}, {pipeline_mode = #tpu.pipeline_mode<synchronous>, transform_indices = @transform_1, window_bounds = array<i64: 32, 128>}, {pipeline_mode = #tpu.pipeline_mode<synchronous>, transform_indices = @transform_2, window_bounds = array<i64: 1, 128>}, {pipeline_mode = #tpu.pipeline_mode<synchronous>, transform_indices = @transform_3, window_bounds = array<i64: 128, 5>}, {pipeline_mode = #tpu.pipeline_mode<synchronous>, transform_indices = @transform_4, window_bounds = array<i64: 1, 5>}, {transform_indices = @transform_5, window_bounds = array<i64: 8, 5>}]} {
    %c0 = arith.constant 0 : index
    %c0_0 = arith.constant 0 : index
    %0 = vector.load %arg1[%c0, %c0_0] : memref<8x32xf32, #tpu.memory_space<vmem>>, vector<8x32xf32>
    %1 = arith.truncf %0 : vector<8x32xf32> to vector<8x32xbf16>
    %c0_1 = arith.constant 0 : index
    %c0_2 = arith.constant 0 : index
    %2 = vector.load %arg2[%c0_1, %c0_2] : memref<32x128xbf16, #tpu.memory_space<vmem>>, vector<32x128xbf16>
    %cst = arith.constant dense<0.000000e+00> : vector<8x128xf32>
    %3 = tpu.matmul %1, %2, %cst {dimension_numbers = #tpu.dot_dimension_numbers<[1], [0], [0], [1], [0, 0, 1, 1], [], []>} : vector<8x32xbf16>, vector<32x128xbf16>, vector<8x128xf32> -> vector<8x128xf32>
    %c0_3 = arith.constant 0 : index
    %c0_4 = arith.constant 0 : index
    %4 = vector.load %arg3[%c0_3, %c0_4] : memref<1x128xf32, #tpu.memory_space<vmem>>, vector<1x128xf32>
    %5 = vector.broadcast %4 : vector<1x128xf32> to vector<8x128xf32>
    %6 = arith.addf %3, %5 : vector<8x128xf32>
    %cst_5 = arith.constant 0.000000e+00 : f32
    %7 = vector.broadcast %cst_5 : f32 to vector<8x128xf32>
    %8 = arith.maximumf %6, %7 : vector<8x128xf32>
    %9 = arith.truncf %8 : vector<8x128xf32> to vector<8x128xbf16>
    %c0_6 = arith.constant 0 : index
    %c0_7 = arith.constant 0 : index
    %10 = vector.load %arg4[%c0_6, %c0_7] : memref<128x5xbf16, #tpu.memory_space<vmem>>, vector<128x5xbf16>
    %cst_8 = arith.constant dense<0.000000e+00> : vector<8x5xf32>
    %11 = tpu.matmul %9, %10, %cst_8 {dimension_numbers = #tpu.dot_dimension_numbers<[1], [0], [0], [1], [0, 0, 1, 1], [], []>} : vector<8x128xbf16>, vector<128x5xbf16>, vector<8x5xf32> -> vector<8x5xf32>
    %c0_9 = arith.constant 0 : index
    %c0_10 = arith.constant 0 : index
    %12 = vector.load %arg5[%c0_9, %c0_10] : memref<1x5xf32, #tpu.memory_space<vmem>>, vector<1x5xf32>
    %13 = vector.broadcast %12 : vector<1x5xf32> to vector<8x5xf32>
    %14 = arith.addf %11, %13 : vector<8x5xf32>
    %cst_11 = arith.constant 0.000000e+00 : f32
    %15 = vector.broadcast %cst_11 : f32 to vector<8x5xf32>
    %16 = arith.maximumf %14, %15 : vector<8x5xf32>
    %cst_12 = arith.constant dense<0xFF800000> : vector<8xf32>
    %17 = vector.multi_reduction <maximumf>, %16, %cst_12 [1] : vector<8x5xf32> to vector<8xf32>
    %18 = vector.shape_cast %17 : vector<8xf32> to vector<8x1xf32>
    %19 = vector.broadcast %18 : vector<8x1xf32> to vector<8x5xf32>
    %20 = arith.subf %16, %19 : vector<8x5xf32>
    %21 = math.exp %20 : vector<8x5xf32>
    %cst_13 = arith.constant dense<0.000000e+00> : vector<8xf32>
    %22 = vector.multi_reduction <add>, %21, %cst_13 [1] : vector<8x5xf32> to vector<8xf32>
    %23 = vector.shape_cast %22 : vector<8xf32> to vector<8x1xf32>
    %24 = math.log %23 : vector<8x1xf32>
    %25 = vector.broadcast %24 : vector<8x1xf32> to vector<8x5xf32>
    %26 = arith.subf %20, %25 : vector<8x5xf32>
    %c0_14 = arith.constant 0 : index
    %c0_15 = arith.constant 0 : index
    %27 = vector.load %arg6[%c0_14, %c0_15] : memref<8x5xf32, #tpu.memory_space<vmem>>, vector<8x5xf32>
    tpu.vector_store %arg6[%c0_14, %c0_15], %26 {strides = array<i32>} : memref<8x5xf32, #tpu.memory_space<vmem>>, vector<8x5xf32>,
    return
  }
  func.func @transform_0(%arg0: i32) -> (i32, i32) {
    %c0_i32 = arith.constant 0 : i32
    %c0_i32_0 = arith.constant 0 : i32
    return %arg0, %c0_i32 : i32, i32
  }
  func.func @transform_1(%arg0: i32) -> (i32, i32) {
    %c0_i32 = arith.constant 0 : i32
    %c0_i32_0 = arith.constant 0 : i32
    %c0_i32_1 = arith.constant 0 : i32
    return %c0_i32, %c0_i32_0 : i32, i32
  }
  func.func @transform_2(%arg0: i32) -> (i32, i32) {
    %c0_i32 = arith.constant 0 : i32
    %c0_i32_0 = arith.constant 0 : i32
    %c0_i32_1 = arith.constant 0 : i32
    return %c0_i32, %c0_i32_0 : i32, i32
  }
  func.func @transform_3(%arg0: i32) -> (i32, i32) {
    %c0_i32 = arith.constant 0 : i32
    %c0_i32_0 = arith.constant 0 : i32
    %c0_i32_1 = arith.constant 0 : i32
    return %c0_i32, %c0_i32_0 : i32, i32
  }
  func.func @transform_4(%arg0: i32) -> (i32, i32) {
    %c0_i32 = arith.constant 0 : i32
    %c0_i32_0 = arith.constant 0 : i32
    %c0_i32_1 = arith.constant 0 : i32
    return %c0_i32, %c0_i32_0 : i32, i32
  }
  func.func @transform_5(%arg0: i32) -> (i32, i32) {
    %c0_i32 = arith.constant 0 : i32
    %c0_i32_0 = arith.constant 0 : i32
    return %arg0, %c0_i32 : i32, i32
  }
}

</mosaic_0001>

<llo_original>
// kernel: tpu_custom_call.1
$region0: #{tpu_custom_call.1}
  #allocation0 [shape = 'u32[]', space=smem, size = 0x4, offset = 0x4, fixed_abs, tag = 'smem constant byte address 0x4 - core index']
  #allocation1 [shape = 'u32[144,128]{1,0:T(1,128)}', space=vmem, size = 0x12000, scoped, tag = 'internal scratch']
  %s0 = inlined_call_operand.vmem [shape: f32[8,32], index: 0, kind: input, shape index: {}]
  %s1 = inlined_call_operand.vmem [shape: bf16[32,128], index: 1, kind: input, shape index: {}]
  %s2 = inlined_call_operand.vmem [shape: f32[1,128], index: 2, kind: input, shape index: {}]
  %s3 = inlined_call_operand.vmem [shape: bf16[128,5], index: 3, kind: input, shape index: {}]
  %s4 = inlined_call_operand.vmem [shape: f32[1,5], index: 4, kind: input, shape index: {}]
  %s5 = inlined_call_operand.hbm [shape: f32[8,5], index: 5, kind: output, shape index: {}]
  %s6 = sld [smem:[#allocation0]]
  $region30: #{tpu_custom_call.1} parent=0
    _
  %s8 = ssub.s32 1, %s6
  %s9 = scalar_select 0, %s8, %s6
  $region1: #{tpu_custom_call.1} parent=0
    #allocation2 [shape = 'u8[4096]{0}', space=vmem, size = 0x1000, scoped, tag = 'output window, operand 0, single buffered']
    #allocation3 [shape = 's32[1]{0}', space=sflag, size = 0x4, scoped, tag = 'scoped memory for tpu_custom_call.1']
    %10 = vsyncpa [#allocation3], 0
    // Predicated region
    $region2: #{tpu_custom_call.1} parent=1 // pred_check
      _
    $region3: #{tpu_custom_call.1} parent=1 // pred_check_branch
      %12 = sbr.rel (0) target = $region5
    $region4: #{tpu_custom_call.1} parent=1 // pred_region
      _
    $region5: #{tpu_custom_call.1} parent=1 // pred_fallthru
      _
    // Predicated region
    $region6: #{tpu_custom_call.1} parent=1 // pred_check
      _
    $region7: #{tpu_custom_call.1} parent=1 // pred_check_branch
      %14 = sbr.rel (0) target = $region9
    $region8: #{tpu_custom_call.1} parent=1 // pred_region
      _
    $region9: #{tpu_custom_call.1} parent=1 // pred_fallthru
      _
    // Predicated region
    $region10: #{tpu_custom_call.1} parent=1 // pred_check
      _
    $region11: #{tpu_custom_call.1} parent=1 // pred_check_branch
      %16 = sbr.rel (0) target = $region13
    $region12: #{tpu_custom_call.1} parent=1 // pred_region
      _
    $region13: #{tpu_custom_call.1} parent=1 // pred_fallthru
      _
    // Predicated region
    $region14: #{tpu_custom_call.1} parent=1 // pred_check
      _
    $region15: #{tpu_custom_call.1} parent=1 // pred_check_branch
      %18 = sbr.rel (0) target = $region17
    $region16: #{tpu_custom_call.1} parent=1 // pred_region
      _
    $region17: #{tpu_custom_call.1} parent=1 // pred_fallthru
      _
    // Predicated region
    $region18: #{tpu_custom_call.1} parent=1 // pred_check
      _
    $region19: #{tpu_custom_call.1} parent=1 // pred_check_branch
      %20 = sbr.rel (0) target = $region21
    $region20: #{tpu_custom_call.1} parent=1 // pred_region
      _
    $region21: #{tpu_custom_call.1} parent=1 // pred_fallthru
      _
    %v22 = vld [vmem:[%s0] sm:$0xff]
    %v23 = vpack.c.bf16 %v22, %v22
    %v24 = vld [vmem:[%s1] sm:$0xf]
    %v25 = vld [vmem:[%s1 + $0x4] sm:$0xf]
    %v26 = vld [vmem:[%s1 + $0x8] sm:$0xf]
    %v27 = vld [vmem:[%s1 + $0xc] sm:$0xf]
    %v28 = vld [vmem:[%s2] sm:$0x1]
    %v30 = vlaneseq
    %v31 = vshrl.u32 %v30, 7
    %v32 = vsub.s32 0, %v31
    %v33 = vrot.slane %v28, %v32
    %v39 = vunpack.c.l.b16 %v24
    %v40 = vunpack.c.l.b16 %v25
    %v41 = vunpack.c.l.b16 %v26
    %v42 = vunpack.c.l.b16 %v27
    %v43 = vpack.c.b16 %v40, %v39
    %v44 = vpack.c.b16 %v42, %v41
    %vm47 = vcmask 261120
    %v49 = vsel %vm47, %v23, 0
    %51 = vmatprep.subr.bf16.mxu0 0
    %52 = vmatpush1.bf16.msra.mxu0 0
    %53 = vmatprep.subr.bf16.mxu0 0
    %54 = vmatpush1.bf16.msra.mxu0 0
    %55 = vmatprep.subr.bf16.mxu0 0
    %56 = vmatpush1.bf16.msra.mxu0 0
    %57 = vmatprep.subr.bf16.mxu0 0
    %58 = vmatpush1.bf16.msra.mxu0 0
    %59 = vmatprep.subr.bf16.mxu0 0
    %60 = vmatpush1.bf16.msra.mxu0 0
    %61 = vmatprep.subr.bf16.mxu0 0
    %62 = vmatpush1.bf16.msra.mxu0 0
    %63 = vmatprep.subr.bf16.mxu0 0
    %64 = vmatpush1.bf16.msra.mxu0 %v44
    %65 = vmatprep.subr.bf16.mxu0 0
    %66 = vmatpush1.bf16.msra.mxu0 %v43
    %67 = vmatprep.subr.bf16.mxu0 0
    %68 = vmatpush2.bf16.msra.mxu0 0
    %69 = vmatprep.subr.bf16.mxu0 0
    %70 = vmatpush2.bf16.msra.mxu0 0
    %71 = vmatprep.subr.bf16.mxu0 0
    %72 = vmatpush2.bf16.msra.mxu0 0
    %73 = vmatprep.subr.bf16.mxu0 0
    %74 = vmatpush2.bf16.msra.mxu0 0
    %75 = vmatprep.subr.bf16.mxu0 0
    %76 = vmatpush2.bf16.msra.mxu0 0
    %77 = vmatprep.subr.bf16.mxu0 0
    %78 = vmatpush2.bf16.msra.mxu0 0
    %79 = vmatprep.subr.bf16.mxu0 0
    %80 = vmatpush2.bf16.msra.mxu0 0
    %81 = vmatprep.subr.bf16.mxu0 0
    %82 = vmatpush2.bf16.msra.mxu0 0
    %83 = vmatprep.mubr.bf16.mxu0 0
    %84 = vmatmul.mubr.bf16.gmra.mxu0 %v49
    %v85 = vpop.f32.mrf.mxu0
    %v86 = vadd.f32 %v33, %v85
    %v87 = vpop.f32.mrf.mxu0
    %v88 = vpop.f32.mrf.mxu0
    %v89 = vpop.f32.mrf.mxu0
    %90 = vdwg.mxu0
    %v91 = vmax.f32 %v86, 0.0
    %v92 = vpack.c.bf16 %v91, %v91
    %v93 = vld [vmem:[%s3] sm:$0xf]
    %v94 = vld [vmem:[%s3 + $0x4] sm:$0xf]
    %v95 = vld [vmem:[%s3 + $0x8] sm:$0xf]
    %v96 = vld [vmem:[%s3 + $0xc] sm:$0xf]
    %v97 = vld [vmem:[%s3 + $0x10] sm:$0xf]
    %v98 = vld [vmem:[%s3 + $0x14] sm:$0xf]
    %v99 = vld [vmem:[%s3 + $0x18] sm:$0xf]
    %v100 = vld [vmem:[%s3 + $0x1c] sm:$0xf]
    %v101 = vld [vmem:[%s3 + $0x20] sm:$0xf]
    %v102 = vld [vmem:[%s3 + $0x24] sm:$0xf]
    %v103 = vld [vmem:[%s3 + $0x28] sm:$0xf]
    %v104 = vld [vmem:[%s3 + $0x2c] sm:$0xf]
    %v105 = vld [vmem:[%s3 + $0x30] sm:$0xf]
    %v106 = vld [vmem:[%s3 + $0x34] sm:$0xf]
    %v107 = vld [vmem:[%s3 + $0x38] sm:$0xf]
    %v108 = vld [vmem:[%s3 + $0x3c] sm:$0xf]
    %v109 = vld [vmem:[%s4] sm:$0x1]
    %v111 = vlaneseq
    %v112 = vshrl.u32 %v111, 7
    %v113 = vsub.s32 0, %v112
    %v114 = vrot.slane %v109, %v113
    %v132 = vunpack.c.l.b16 %v93
    %v133 = vunpack.c.l.b16 %v94
    %v134 = vunpack.c.l.b16 %v95
    %v135 = vunpack.c.l.b16 %v96
    %v136 = vunpack.c.l.b16 %v97
    %v137 = vunpack.c.l.b16 %v98
    %v138 = vunpack.c.l.b16 %v99
    %v139 = vunpack.c.l.b16 %v100
    %v140 = vunpack.c.l.b16 %v101
    %v141 = vunpack.c.l.b16 %v102
    %v142 = vunpack.c.l.b16 %v103
    %v143 = vunpack.c.l.b16 %v104
    %v144 = vunpack.c.l.b16 %v105
    %v145 = vunpack.c.l.b16 %v106
    %v146 = vunpack.c.l.b16 %v107
    %v147 = vunpack.c.l.b16 %v108
    %v148 = vpack.c.b16 %v133, %v132
    %v149 = vpack.c.b16 %v135, %v134
    %v150 = vpack.c.b16 %v137, %v136
    %v151 = vpack.c.b16 %v139, %v138
    %v152 = vpack.c.b16 %v141, %v140
    %v153 = vpack.c.b16 %v143, %v142
    %v154 = vpack.c.b16 %v145, %v144
    %v155 = vpack.c.b16 %v147, %v146
    %164 = vmatprep.subr.bf16.mxu0 0
    %165 = vmatpush1.bf16.msra.mxu0 %v155
    %166 = vmatprep.subr.bf16.mxu0 0
    %167 = vmatpush1.bf16.msra.mxu0 %v154
    %168 = vmatprep.subr.bf16.mxu0 0
    %169 = vmatpush1.bf16.msra.mxu0 %v153
    %170 = vmatprep.subr.bf16.mxu0 0
    %171 = vmatpush1.bf16.msra.mxu0 %v152
    %172 = vmatprep.subr.bf16.mxu0 0
    %173 = vmatpush1.bf16.msra.mxu0 %v151
    %174 = vmatprep.subr.bf16.mxu0 0
    %175 = vmatpush1.bf16.msra.mxu0 %v150
    %176 = vmatprep.subr.bf16.mxu0 0
    %177 = vmatpush1.bf16.msra.mxu0 %v149
    %178 = vmatprep.subr.bf16.mxu0 0
    %179 = vmatpush1.bf16.msra.mxu0 %v148
    %180 = vmatprep.subr.bf16.mxu0 0
    %181 = vmatpush2.bf16.msra.mxu0 0
    %182 = vmatprep.subr.bf16.mxu0 0
    %183 = vmatpush2.bf16.msra.mxu0 0
    %184 = vmatprep.subr.bf16.mxu0 0
    %185 = vmatpush2.bf16.msra.mxu0 0
    %186 = vmatprep.subr.bf16.mxu0 0
    %187 = vmatpush2.bf16.msra.mxu0 0
    %188 = vmatprep.subr.bf16.mxu0 0
    %189 = vmatpush2.bf16.msra.mxu0 0
    %190 = vmatprep.subr.bf16.mxu0 0
    %191 = vmatpush2.bf16.msra.mxu0 0
    %192 = vmatprep.subr.bf16.mxu0 0
    %193 = vmatpush2.bf16.msra.mxu0 0
    %194 = vmatprep.subr.bf16.mxu0 0
    %195 = vmatpush2.bf16.msra.mxu0 0
    %196 = vmatprep.mubr.bf16.mxu0 0
    %197 = vmatmul.mubr.bf16.gmra.mxu0 %v92
    %v198 = vpop.f32.mrf.mxu0
    %v199 = vadd.f32 %v114, %v198
    %v200 = vpop.f32.mrf.mxu0
    %v201 = vpop.f32.mrf.mxu0
    %v202 = vpop.f32.mrf.mxu0
    %203 = vdwg.mxu0
    %v204 = vmax.f32 %v199, 0.0
    %vm205 = vcmask 39936
    %v206 = vsel %vm205, %v204, -inf
    %207 = vmax.xlane.f32.xlu0 %v206
    %v208 = vpop.xlane.xlu0 %207
    %v209 = vsub.f32 %v204, %v208
    %v210 = vmul.f32 %v209, 1.442695
    %v211 = vpow.pop %v210
    %v212 = vsel %vm205, %v211, 0.0
    %213 = vadd.xlane.f32.xlu0 %v212
    %v214 = vpop.xlane.xlu0 %213
    %v215 = vlog2.pop %v214
    %v216 = vmul.f32 %v215, 0.6931472
    %v217 = vsub.f32 %v209, %v216
    %218 = vst.msk [vmem:[#allocation2] sm:$0xff] %vm205, %v217
    // Predicated region
    $region22: #{tpu_custom_call.1} parent=1 // pred_check
      _
    $region23: #{tpu_custom_call.1} parent=1 // pred_check_branch
      %220 = sbr.rel (0) target = $region25
    $region24: #{tpu_custom_call.1} parent=1 // pred_region
      %s222 = ssub.s32 128, 128
      %223 = vsyncadd [#allocation3], %s222
      %s225 = sshll.u32 [#allocation2], 4
      %s226 = int_to_ptr.vmem [resolvable:$true] %s225
      %228 = dma.vmem_to_hbm [thread:$0]  %s226, 128, %s5, [#allocation3]
    $region25: #{tpu_custom_call.1} parent=1 // pred_fallthru
      _
    // Predicated region
    $region26: #{tpu_custom_call.1} parent=1 // pred_check
      _
    $region27: #{tpu_custom_call.1} parent=1 // pred_check_branch
      %230 = sbr.rel (0) target = $region29
    $region28: #{tpu_custom_call.1} parent=1 // pred_region
      %231 = dma.done [#allocation3], 128
    $region29: #{tpu_custom_call.1} parent=1 // pred_fallthru
      _
    %232 = vsyncpa [#allocation3], 1

</llo_original>
